<compile_context>
chip_gen: v7x
topology: tpu7x:2x2x1
jax: 0.10.0
libtpu: 0.0.40
codegen_flags: <defaults>
</compile_context>

<pallas_src>
import functools

import jax
import jax.numpy as jnp
from jax.experimental import pallas as pl
from jax.experimental.pallas import tpu as pltpu

EPS = 1e-5  # nn.BatchNorm2d default


# ---------------------------------------------------------------------------
# helpers
# ---------------------------------------------------------------------------
def _round_up(x, m):
    return (x + m - 1) // m * m


def _pad2d(a, rows, cols):
    r, c = a.shape
    return jnp.pad(a, ((0, rows - r), (0, cols - c)))


def _choose_tile(M, tile_m):
    tm = min(tile_m, _round_up(M, 8))
    Mp = _round_up(M, tm)
    return tm, Mp


@functools.lru_cache(maxsize=None)
def _vmem_limit_bytes():
    """Generation-aware VMEM limit (~60% of physical, clamped to [32, 100] MiB)."""
    try:
        phys = int(pltpu.get_tpu_info().vmem_capacity_bytes)
    except Exception:
        phys = 64 * 1024 * 1024
    return max(32 * 1024 * 1024, min(int(phys * 0.6), 100 * 1024 * 1024))


def im2col(x_nhwc, k, stride, pad):
    """(M, k*k*C) patches, K-order = (kh, kw, Cin). Only used for stride!=1 conv1
    and the 1x1 projection shortcut (where it is a plain strided subsample)."""
    N, H, W, C = x_nhwc.shape
    if pad:
        x_nhwc = jnp.pad(x_nhwc, ((0, 0), (pad, pad), (pad, pad), (0, 0)))
    Ho = (H + 2 * pad - k) // stride + 1
    Wo = (W + 2 * pad - k) // stride + 1
    cols = []
    for i in range(k):
        for j in range(k):
            cols.append(x_nhwc[:, i:i + stride * Ho:stride, j:j + stride * Wo:stride, :])
    patches = jnp.concatenate(cols, axis=-1) if len(cols) > 1 else cols[0]
    return patches.reshape(N * Ho * Wo, k * k * C), (Ho, Wo)


def weight_to_mat(w_oihw):
    # torch (Cout, Cin, kh, kw) -> (kh*kw*Cin, Cout), matching im2col K-order.
    cout, cin, kh, kw = w_oihw.shape
    return jnp.transpose(w_oihw, (2, 3, 1, 0)).reshape(kh * kw * cin, cout)


def weight_to_taps(w_oihw, cin_p, cout_p):
    """torch (Cout, Cin, 3, 3) -> (9*cin_p, cout_p), tap-major with per-tap
    channel padding (so tap t occupies rows [t*cin_p, (t+1)*cin_p))."""
    cout, cin, kh, kw = w_oihw.shape
    w = jnp.transpose(w_oihw, (2, 3, 1, 0)).reshape(kh * kw, cin, cout)
    w = jnp.pad(w, ((0, 0), (0, cin_p - cin), (0, cout_p - cout)))
    return w.reshape(kh * kw * cin_p, cout_p)


# ---------------------------------------------------------------------------
# im2col matmul kernel (stride!=1 conv1 and the 1x1 projection shortcut)
# ---------------------------------------------------------------------------
def _matmul_stats_kernel(p_ref, w_ref, o_ref, sum_ref, sq_ref):
    acc = jnp.dot(p_ref[...], w_ref[...], preferred_element_type=jnp.float32)
    o_ref[...] = acc.astype(o_ref.dtype)
    # per-tile partial stats (reduced across tiles in JAX) -> M axis stays parallel
    sum_ref[0] = jnp.sum(acc, axis=0, keepdims=True)
    sq_ref[0] = jnp.sum(acc * acc, axis=0, keepdims=True)


def matmul_stats(patches, w_mat, tm, Mp):
    """M-tiled bf16 MXU matmul; bf16 output + per-tile channel sum / sumsq."""
    M, K = patches.shape
    Cout = w_mat.shape[1]
    Kp = _round_up(K, 128)
    Cp = _round_up(Cout, 128)
    G = Mp // tm
    p = _pad2d(patches, Mp, Kp).astype(jnp.bfloat16)
    w = _pad2d(w_mat, Kp, Cp).astype(jnp.bfloat16)

    flops = 2 * Mp * Kp * Cp
    bytes_acc = Mp * Kp * 2 + Kp * Cp * 2 + Mp * Cp * 2 + 2 * G * Cp * 4

    return pl.pallas_call(
        _matmul_stats_kernel,
        out_shape=(jax.ShapeDtypeStruct((Mp, Cp), jnp.bfloat16),
                   jax.ShapeDtypeStruct((G, 1, Cp), jnp.float32),
                   jax.ShapeDtypeStruct((G, 1, Cp), jnp.float32)),
        grid=(G,),
        in_specs=[pl.BlockSpec((tm, Kp), lambda i: (i, 0)),
                  pl.BlockSpec((Kp, Cp), lambda i: (0, 0))],     # weight resident
        out_specs=(pl.BlockSpec((tm, Cp), lambda i: (i, 0)),
                   pl.BlockSpec((1, 1, Cp), lambda i: (i, 0, 0)),
                   pl.BlockSpec((1, 1, Cp), lambda i: (i, 0, 0))),
        compiler_params=pltpu.CompilerParams(
            dimension_semantics=("parallel",),
            vmem_limit_bytes=_vmem_limit_bytes()),
        cost_estimate=pl.CostEstimate(flops=flops, transcendentals=0,
                                      bytes_accessed=bytes_acc),
    )(p, w)


# ---------------------------------------------------------------------------
# direct 3x3 stride-1 conv kernel (no HBM im2col), optional fused input affine
# ---------------------------------------------------------------------------
def _make_direct3x3_kernel(Lw, Wp, cin_p, cout_p, apply_affine):
    def kernel(*refs):
        if apply_affine:
            (x_ref, w_ref, sc_ref, sh_ref, imask_ref, vmask_ref,
             ow_ref, sum_ref, sq_ref, h_ref) = refs
            # Fused BN1-affine + ReLU on the zero-padded raw conv1 output; the
            # interior mask forces the halo ring back to zero after the affine.
            h = jnp.maximum(
                x_ref[0].astype(jnp.float32) * sc_ref[...] + sh_ref[...], 0.0)
            h_ref[...] = (h * imask_ref[...]).astype(jnp.bfloat16)
        else:
            x_ref, w_ref, vmask_ref, ow_ref, sum_ref, sq_ref = refs
            h_ref = None

        acc = jnp.zeros((Lw, cout_p), jnp.float32)
        for i in range(3):
            for j in range(3):
                off = i * Wp + j                       # static per-tap row offset
                if apply_affine:
                    lhs = h_ref[pl.ds(off, Lw), :]
                else:
                    lhs = x_ref[0, pl.ds(off, Lw), :]
                wt = w_ref[pl.ds((i * 3 + j) * cin_p, cin_p), :]
                acc = acc + jnp.dot(lhs, wt, preferred_element_type=jnp.float32)

        ow_ref[0] = acc.astype(ow_ref.dtype)           # "wide" bf16 conv output
        accv = acc * vmask_ref[...]                    # mask wrap-around columns
        sum_ref[0] = jnp.sum(accv, axis=0, keepdims=True)
        sq_ref[0] = jnp.sum(accv * accv, axis=0, keepdims=True)

    return kernel


def direct_conv3x3_stats(xpad_flat, w_taps, Ho, Wo, Wp, affine=None):
    """3x3 stride-1 conv on a spatially pre-padded, flattened NHWC input.

    xpad_flat: (N, Lp, cin_p) bf16 with Lp = (Ho+3)*Wp, Wp = Wo+2 (1 top / 2
               bottom / 1 left / 1 right spatial zero pad).
    w_taps:    (9*cin_p, cout_p) bf16 tap-major weight.
    affine:    optional (scale, shift) f32 (1, cin_p) applied (+ReLU, +halo
               re-zeroing) to the input in-register before the tap matmuls.
    Returns (wide output (N, Ho*Wp, cout_p) bf16,
             per-image channel sums / sumsqs (N, 1, cout_p) f32).
    """
    N, Lp, cin_p = xpad_flat.shape
    cout_p = w_taps.shape[1]
    Lw = Ho * Wp
    apply_affine = affine is not None

    # mask of valid (non wrap-around) columns in the wide flat output
    col = jnp.arange(Lw, dtype=jnp.int32) % Wp
    vmask = (col < Wo).astype(jnp.float32).reshape(Lw, 1)

    def const_spec(shape):
        return pl.BlockSpec(shape, lambda n: tuple(0 for _ in shape))

    in_specs = [pl.BlockSpec((1, Lp, cin_p), lambda n: (n, 0, 0)),
                const_spec((9 * cin_p, cout_p))]
    args = [xpad_flat, w_taps]
    scratch = []
    if apply_affine:
        sc, sh = affine
        p = jnp.arange(Lp, dtype=jnp.int32)
        r, c = p // Wp, p % Wp
        interior = (r >= 1) & (r <= Ho) & (c >= 1) & (c <= Wo)
        imask = interior.astype(jnp.float32).reshape(Lp, 1)
        in_specs += [const_spec((1, cin_p)), const_spec((1, cin_p)),
                     const_spec((Lp, 1))]
        args += [sc, sh, imask]
        scratch = [pltpu.VMEM((Lp, cin_p), jnp.bfloat16)]
    in_specs += [const_spec((Lw, 1))]
    args += [vmask]

    kernel = _make_direct3x3_kernel(Lw, Wp, cin_p, cout_p, apply_affine)

    flops = N * 9 * 2 * Lw * cin_p * cout_p
    bytes_acc = (N * (Lp * cin_p * 2 + Lw * cout_p * 2 + 2 * cout_p * 4)
                 + 9 * cin_p * cout_p * 2)

    return pl.pallas_call(
        kernel,
        out_shape=(jax.ShapeDtypeStruct((N, Lw, cout_p), jnp.bfloat16),
                   jax.ShapeDtypeStruct((N, 1, cout_p), jnp.float32),
                   jax.ShapeDtypeStruct((N, 1, cout_p), jnp.float32)),
        grid=(N,),
        in_specs=in_specs,
        out_specs=(pl.BlockSpec((1, Lw, cout_p), lambda n: (n, 0, 0)),
                   pl.BlockSpec((1, 1, cout_p), lambda n: (n, 0, 0)),
                   pl.BlockSpec((1, 1, cout_p), lambda n: (n, 0, 0))),
        scratch_shapes=scratch,
        compiler_params=pltpu.CompilerParams(
            dimension_semantics=("parallel",),
            vmem_limit_bytes=_vmem_limit_bytes()),
        cost_estimate=pl.CostEstimate(flops=flops, transcendentals=0,
                                      bytes_accessed=bytes_acc),
    )(*args)


# ---------------------------------------------------------------------------
# train-mode BN folding and the final BN + residual + ReLU kernel
# ---------------------------------------------------------------------------
def bn_affine(sum_partials, sq_partials, count, gamma, beta):
    """Fold train-mode BN (batch statistics) into per-channel scale/shift (1, Cp)."""
    Cp = sum_partials.shape[-1]
    s = jnp.sum(sum_partials, axis=(0, 1))
    q = jnp.sum(sq_partials, axis=(0, 1))
    mean = s / count
    # TODO(synk): E[x^2]-E[x]^2 in f32; switch to a centered / Welford merge if
    # activation means grow large relative to their std.
    var = jnp.maximum(q / count - mean * mean, 0.0)
    inv = jax.lax.rsqrt(var + EPS)
    g = _pad2d(gamma.astype(jnp.float32), 1, Cp)[0]
    b = _pad2d(beta.astype(jnp.float32), 1, Cp)[0]
    scale = g * inv
    shift = b - mean * scale
    return scale.reshape(1, Cp), shift.reshape(1, Cp)


def _bn_add_relu_kernel(a_ref, sc_ref, sh_ref, r_ref, rsc_ref, rsh_ref, o_ref):
    y = a_ref[...].astype(jnp.float32) * sc_ref[...] + sh_ref[...]
    r = r_ref[...].astype(jnp.float32) * rsc_ref[...] + rsh_ref[...]
    o_ref[...] = jnp.maximum(y + r, 0.0).astype(o_ref.dtype)


def bn_add_relu(a_nhwc, sc, sh, r_nhwc, rsc, rsh, out_dtype=jnp.float32):
    """Per-image BN2-affine + shortcut-BN-affine add + ReLU on compact NHWC blocks."""
    N, Ho, Wo, Cp = a_nhwc.shape

    def sspec():
        return pl.BlockSpec((1, 1, 1, Cp), lambda n: (0, 0, 0, 0))

    def bspec():
        return pl.BlockSpec((1, Ho, Wo, Cp), lambda n: (n, 0, 0, 0))

    sc4, sh4 = sc.reshape(1, 1, 1, Cp), sh.reshape(1, 1, 1, Cp)
    rsc4, rsh4 = rsc.reshape(1, 1, 1, Cp), rsh.reshape(1, 1, 1, Cp)
    r_bytes = jnp.dtype(r_nhwc.dtype).itemsize
    o_bytes = jnp.dtype(out_dtype).itemsize

    return pl.pallas_call(
        _bn_add_relu_kernel,
        out_shape=jax.ShapeDtypeStruct((N, Ho, Wo, Cp), out_dtype),
        grid=(N,),
        in_specs=[bspec(), sspec(), sspec(), bspec(), sspec(), sspec()],
        out_specs=bspec(),
        compiler_params=pltpu.CompilerParams(
            dimension_semantics=("parallel",),
            vmem_limit_bytes=_vmem_limit_bytes()),
        cost_estimate=pl.CostEstimate(
            flops=6 * N * Ho * Wo * Cp, transcendentals=0,
            bytes_accessed=N * Ho * Wo * Cp * (2 + r_bytes + o_bytes) + 4 * Cp * 4),
    )(a_nhwc, sc4, sh4, r_nhwc, rsc4, rsh4)


# ---------------------------------------------------------------------------
# BasicBlock parameters + forward
# ---------------------------------------------------------------------------
def init_basic_block(key, in_channels, out_channels, stride):
    k1, k2, k3 = jax.random.split(key, 3)
    params = {
        "w1": 0.1 * jax.random.normal(k1, (out_channels, in_channels, 3, 3), jnp.float32),
        "g1": jnp.ones((1, out_channels), jnp.float32),
        "b1": jnp.zeros((1, out_channels), jnp.float32),
        "w2": 0.1 * jax.random.normal(k2, (out_channels, out_channels, 3, 3), jnp.float32),
        "g2": jnp.ones((1, out_channels), jnp.float32),
        "b2": jnp.zeros((1, out_channels), jnp.float32),
    }
    if stride != 1 or in_channels != out_channels:
        params["ws"] = 0.1 * jax.random.normal(k3, (out_channels, in_channels, 1, 1), jnp.float32)
        params["gs"] = jnp.ones((1, out_channels), jnp.float32)
        params["bs"] = jnp.zeros((1, out_channels), jnp.float32)
    return params


def basic_block_forward(x_nchw, params, stride, tile_m=1024, out_dtype=jnp.float32):
    x = jnp.transpose(x_nchw, (0, 2, 3, 1)).astype(jnp.float32)   # NCHW -> NHWC
    N, H, W, Cin = x.shape
    Cout = params["w1"].shape[0]
    Cp = _round_up(Cout, 128)
    Cin_p = _round_up(Cin, 128)
    x_bf = x.astype(jnp.bfloat16)

    # ---- conv1 (3x3, stride s, pad 1) + batch stats ------------------------
    if stride == 1:
        Ho, Wo = H, W
        Wp = Wo + 2
        xpad = jnp.pad(x_bf, ((0, 0), (1, 2), (1, 1), (0, Cin_p - Cin)))
        xpad = xpad.reshape(N, (Ho + 3) * Wp, Cin_p)
        w1 = weight_to_taps(params["w1"], Cin_p, Cp).astype(jnp.bfloat16)
        ow1, s1, q1 = direct_conv3x3_stats(xpad, w1, Ho, Wo, Wp)
        a1c = ow1.reshape(N, Ho, Wp, Cp)[:, :, :Wo, :]          # compact NHWC bf16
    else:
        p1, (Ho, Wo) = im2col(x_bf, 3, stride, 1)
        M1 = p1.shape[0]
        tm, Mp = _choose_tile(M1, tile_m)
        acc1, s1, q1 = matmul_stats(p1, weight_to_mat(params["w1"]), tm, Mp)
        a1c = acc1[:M1].reshape(N, Ho, Wo, Cp)
    M = N * Ho * Wo
    sc1, sh1 = bn_affine(s1, q1, M, params["g1"], params["b1"])

    # ---- conv2 (3x3, stride 1, pad 1) with BN1-affine + ReLU fused in ------
    Wp2 = Wo + 2
    a1pad = jnp.pad(a1c, ((0, 0), (1, 2), (1, 1), (0, 0)))
    a1pad = a1pad.reshape(N, (Ho + 3) * Wp2, Cp)
    w2 = weight_to_taps(params["w2"], Cp, Cp).astype(jnp.bfloat16)
    ow2, s2, q2 = direct_conv3x3_stats(a1pad, w2, Ho, Wo, Wp2, affine=(sc1, sh1))
    sc2, sh2 = bn_affine(s2, q2, M, params["g2"], params["b2"])
    a2c = ow2.reshape(N, Ho, Wp2, Cp)[:, :, :Wo, :]

    # ---- shortcut -----------------------------------------------------------
    if stride != 1 or Cin != Cout:
        # 1x1 projection conv (+ its BN, folded into the final kernel)
        xs = x_bf[:, ::stride, ::stride, :].reshape(M, Cin)
        tm, Mp = _choose_tile(M, tile_m)
        r, ss, qs = matmul_stats(xs, weight_to_mat(params["ws"]), tm, Mp)
        rsc, rsh = bn_affine(ss, qs, M, params["gs"], params["bs"])
        r_nhwc = r[:M].reshape(N, Ho, Wo, Cp)
    else:
        # identity shortcut: f32, channel pad only when C is not already 128-aligned
        r_nhwc = x if Cin == Cp else jnp.pad(x, ((0, 0), (0, 0), (0, 0), (0, Cp - Cin)))
        rsc = jnp.ones((1, Cp), jnp.float32)
        rsh = jnp.zeros((1, Cp), jnp.float32)

    # ---- BN2 + shortcut add + ReLU ------------------------------------------
    out = bn_add_relu(a2c, sc2, sh2, r_nhwc, rsc, rsh, out_dtype=out_dtype)
    out = out[..., :Cout]
    # TODO(synk): keep NHWC / bf16 end-to-end when chaining blocks; NCHW f32 is
    # kept here to match the nn.Module contract.
    return jnp.transpose(out, (0, 3, 1, 2))                      # NHWC -> NCHW


# ---------------------------------------------------------------------------
# Pure-JAX reference (train-mode BN, f32) for correctness checking
# ---------------------------------------------------------------------------
def reference_forward(x_nchw, params, stride):
    x = x_nchw.astype(jnp.float32)

    def conv(v, w, s, pad):
        return jax.lax.conv_general_dilated(
            v, w, window_strides=(s, s), padding=((pad, pad), (pad, pad)),
            dimension_numbers=("NCHW", "OIHW", "NCHW"))

    def bn(y, g, b):
        mean = jnp.mean(y, axis=(0, 2, 3), keepdims=True)
        var = jnp.mean((y - mean) ** 2, axis=(0, 2, 3), keepdims=True)
        return ((y - mean) * jax.lax.rsqrt(var + EPS)
                * g.reshape(1, -1, 1, 1) + b.reshape(1, -1, 1, 1))

    out = jax.nn.relu(bn(conv(x, params["w1"], stride, 1), params["g1"], params["b1"]))
    out = bn(conv(out, params["w2"], 1, 1), params["g2"], params["b2"])
    if "ws" in params:
        sc = bn(conv(x, params["ws"], stride, 0), params["gs"], params["bs"])
    else:
        sc = x
    return jax.nn.relu(out + sc)


if __name__ == "__main__":
    key = jax.random.PRNGKey(0)
    kx1, kx2, kp1, kp2 = jax.random.split(key, 4)

    # Case 1: projection shortcut (stride=2, Cin != Cout). tile_m=64 forces a
    # multi-tile grid on the im2col/projection path so the per-tile partial BN
    # statistics and their JAX-side reduction are exercised.
    in_c, out_c, stride = 4, 8, 2
    x1 = jax.random.normal(kx1, (2, in_c, 16, 16), jnp.float32)
    params1 = init_basic_block(kp1, in_c, out_c, stride)
    o1 = jax.block_until_ready(basic_block_forward(x1, params1, stride, tile_m=64))
    r1 = reference_forward(x1, params1, stride)
    assert o1.shape == (2, out_c, 8, 8)
    assert bool(jnp.all(jnp.isfinite(o1))) and bool(jnp.all(o1 >= 0.0))
    assert float(jnp.max(jnp.abs(o1 - r1))) < 0.2

    # Case 2: identity shortcut (stride=1, Cin == Cout), non-8-aligned spatial
    # width (12), exercising both direct-conv kernels (plain + fused-affine).
    x2 = jax.random.normal(kx2, (2, 8, 12, 12), jnp.float32)
    params2 = init_basic_block(kp2, 8, 8, 1)
    o2 = jax.block_until_ready(basic_block_forward(x2, params2, 1, tile_m=64))
    r2 = reference_forward(x2, params2, 1)
    assert o2.shape == (2, 8, 12, 12)
    assert bool(jnp.all(jnp.isfinite(o2))) and bool(jnp.all(o2 >= 0.0))
    assert float(jnp.max(jnp.abs(o2 - r2))) < 0.2

    print("KERNEL_OK")
</pallas_src>

<mosaic_0001>
module attributes {stable_mosaic.version = 11 : i64} {
  func.func @_matmul_stats_kernel(%arg0: i32, %arg1: memref<64x128xbf16, #tpu.memory_space<vmem>>, %arg2: memref<128x128xbf16, #tpu.memory_space<vmem>>, %arg3: memref<64x128xbf16, #tpu.memory_space<vmem>>, %arg4: memref<1x1x128xf32, #tpu.memory_space<vmem>>, %arg5: memref<1x1x128xf32, #tpu.memory_space<vmem>>) attributes {dimension_semantics = [#tpu.dimension_semantics<parallel>], iteration_bounds = array<i64: 2>, scalar_prefetch = 0 : i64, scratch_operands = 0 : i64, tpu.core_type = #tpu.core_type<tc>, window_params = [{transform_indices = @transform_0, window_bounds = array<i64: 64, 128>}, {pipeline_mode = #tpu.pipeline_mode<synchronous>, transform_indices = @transform_1, window_bounds = array<i64: 128, 128>}, {transform_indices = @transform_2, window_bounds = array<i64: 64, 128>}, {transform_indices = @transform_3, window_bounds = array<i64: 1, 1, 128>}, {transform_indices = @transform_4, window_bounds = array<i64: 1, 1, 128>}]} {
    %c0 = arith.constant 0 : index
    %c0_0 = arith.constant 0 : index
    %0 = vector.load %arg1[%c0, %c0_0] : memref<64x128xbf16, #tpu.memory_space<vmem>>, vector<64x128xbf16>
    %c0_1 = arith.constant 0 : index
    %c0_2 = arith.constant 0 : index
    %1 = vector.load %arg2[%c0_1, %c0_2] : memref<128x128xbf16, #tpu.memory_space<vmem>>, vector<128x128xbf16>
    %cst = arith.constant dense<0.000000e+00> : vector<64x128xf32>
    %2 = tpu.matmul %0, %1, %cst {dimension_numbers = #tpu.dot_dimension_numbers<[1], [0], [0], [1], [0, 0, 1, 1], [], []>} : vector<64x128xbf16>, vector<128x128xbf16>, vector<64x128xf32> -> vector<64x128xf32>
    %3 = arith.truncf %2 : vector<64x128xf32> to vector<64x128xbf16>
    %c0_3 = arith.constant 0 : index
    %c0_4 = arith.constant 0 : index
    %4 = vector.load %arg3[%c0_3, %c0_4] : memref<64x128xbf16, #tpu.memory_space<vmem>>, vector<64x128xbf16>
    tpu.vector_store %arg3[%c0_3, %c0_4], %3 {strides = array<i32>} : memref<64x128xbf16, #tpu.memory_space<vmem>>, vector<64x128xbf16>,
    %cst_5 = arith.constant dense<0.000000e+00> : vector<128xf32>
    %5 = vector.multi_reduction <add>, %2, %cst_5 [0] : vector<64x128xf32> to vector<128xf32>
    %6 = vector.shape_cast %5 : vector<128xf32> to vector<1x128xf32>
    %c0_6 = arith.constant 0 : index
    %c0_7 = arith.constant 0 : index
    %c0_8 = arith.constant 0 : index
    %7 = vector.load %arg4[%c0_6, %c0_7, %c0_8] : memref<1x1x128xf32, #tpu.memory_space<vmem>>, vector<1x1x128xf32>
    %8 = vector.shape_cast %7 : vector<1x1x128xf32> to vector<1x128xf32>
    %9 = vector.shape_cast %6 : vector<1x128xf32> to vector<1x1x128xf32>
    tpu.vector_store %arg4[%c0_6, %c0_7, %c0_8], %9 {strides = array<i32>} : memref<1x1x128xf32, #tpu.memory_space<vmem>>, vector<1x1x128xf32>,
    %10 = arith.mulf %2, %2 : vector<64x128xf32>
    %cst_9 = arith.constant dense<0.000000e+00> : vector<128xf32>
    %11 = vector.multi_reduction <add>, %10, %cst_9 [0] : vector<64x128xf32> to vector<128xf32>
    %12 = vector.shape_cast %11 : vector<128xf32> to vector<1x128xf32>
    %c0_10 = arith.constant 0 : index
    %c0_11 = arith.constant 0 : index
    %c0_12 = arith.constant 0 : index
    %13 = vector.load %arg5[%c0_10, %c0_11, %c0_12] : memref<1x1x128xf32, #tpu.memory_space<vmem>>, vector<1x1x128xf32>
    %14 = vector.shape_cast %13 : vector<1x1x128xf32> to vector<1x128xf32>
    %15 = vector.shape_cast %12 : vector<1x128xf32> to vector<1x1x128xf32>
    tpu.vector_store %arg5[%c0_10, %c0_11, %c0_12], %15 {strides = array<i32>} : memref<1x1x128xf32, #tpu.memory_space<vmem>>, vector<1x1x128xf32>,
    return
  }
  func.func @transform_0(%arg0: i32) -> (i32, i32) {
    %c0_i32 = arith.constant 0 : i32
    %c0_i32_0 = arith.constant 0 : i32
    return %arg0, %c0_i32 : i32, i32
  }
  func.func @transform_1(%arg0: i32) -> (i32, i32) {
    %c0_i32 = arith.constant 0 : i32
    %c0_i32_0 = arith.constant 0 : i32
    %c0_i32_1 = arith.constant 0 : i32
    return %c0_i32, %c0_i32_0 : i32, i32
  }
  func.func @transform_2(%arg0: i32) -> (i32, i32) {
    %c0_i32 = arith.constant 0 : i32
    %c0_i32_0 = arith.constant 0 : i32
    return %arg0, %c0_i32 : i32, i32
  }
  func.func @transform_3(%arg0: i32) -> (i32, i32, i32) {
    %c0_i32 = arith.constant 0 : i32
    %c0_i32_0 = arith.constant 0 : i32
    %c0_i32_1 = arith.constant 0 : i32
    return %arg0, %c0_i32, %c0_i32_0 : i32, i32, i32
  }
  func.func @transform_4(%arg0: i32) -> (i32, i32, i32) {
    %c0_i32 = arith.constant 0 : i32
    %c0_i32_0 = arith.constant 0 : i32
    %c0_i32_1 = arith.constant 0 : i32
    return %arg0, %c0_i32, %c0_i32_0 : i32, i32, i32
  }
}

</mosaic_0001>

<llo_original>
// kernel: tpu_custom_call.1
$region0: #{tpu_custom_call.1}
  #allocation0 [shape = 'u32[]', space=smem, size = 0x4, offset = 0x4, fixed_abs, tag = 'smem constant byte address 0x4 - core index']
  #allocation1 [shape = 'u32[144,128]{1,0:T(1,128)}', space=vmem, size = 0x12000, scoped, tag = 'internal scratch']
  %s0 = inlined_call_operand.hbm [shape: bf16[128,128], index: 0, kind: input, shape index: {}]
  %s1 = inlined_call_operand.hbm [shape: bf16[128,128], index: 1, kind: input, shape index: {}]
  %s2 = inlined_call_operand.hbm [shape: bf16[128,128], index: 2, kind: output, shape index: {0}]
  %s3 = inlined_call_operand.hbm [shape: f32[2,1,128], index: 3, kind: output, shape index: {1}]
  %s4 = inlined_call_operand.hbm [shape: f32[2,1,128], index: 4, kind: output, shape index: {2}]
  %5 = xla_tuple %s2, %s3, %s4
  %s6 = sld [smem:[#allocation0]]
  $region65: #{tpu_custom_call.1} parent=0
    _
  %s8 = ssub.s32 1, %s6
  %s9 = scalar_select 0, %s8, %s6
  $region1: #{tpu_custom_call.1} parent=0
    #allocation2 [shape = 'u8[32768]{0}', space=vmem, size = 0x8000, scoped, tag = 'input window, operand 0']
    #allocation3 [shape = 's32[2]{0}', space=sflag, size = 0x8, scoped, tag = 'scoped memory for tpu_custom_call.1']
    #allocation4 [shape = 's32[2]{0}', space=sflag, size = 0x8, scoped, tag = 'scoped memory for tpu_custom_call.1']
    #allocation5 [shape = 'u8[32768]{0}', space=vmem, size = 0x8000, scoped, tag = 'input window, operand 1, single buffered']
    #allocation6 [shape = 's32[1]{0}', space=sflag, size = 0x4, scoped, tag = 'scoped memory for tpu_custom_call.1']
    #allocation7 [shape = 'u8[32768]{0}', space=vmem, size = 0x8000, scoped, tag = 'output window, operand 0']
    #allocation8 [shape = 'u8[1024]{0}', space=vmem, size = 0x400, scoped, tag = 'output window, operand 1']
    #allocation9 [shape = 's32[2]{0}', space=sflag, size = 0x8, scoped, tag = 'scoped memory for tpu_custom_call.1']
    #allocation10 [shape = 'u8[1024]{0}', space=vmem, size = 0x400, scoped, tag = 'output window, operand 2']
    %10 = vsyncpa [#allocation3], 0
    %s11 = scalar_lea.sflag [#allocation3], 1
    %12 = vsyncpa %s11, 0
    %13 = vsyncpa [#allocation6], 0
    %14 = vsyncpa [#allocation4], 0
    %s15 = scalar_lea.sflag [#allocation4], 1
    %16 = vsyncpa %s15, 0
    %17 = vsyncpa [#allocation9], 0
    %s18 = scalar_lea.sflag [#allocation9], 1
    %19 = vsyncpa %s18, 0
    loop: start=0, step=1, limit=4
    $region2: #{tpu_custom_call.1} parent=1 // loop_pre_header
      _
    $region3: #{tpu_custom_call.1} parent=1 // loop_header
      %s21 = sphi 0, %s25
      %p22 = scmp.ge.s32.totalorder %s21, 4
      %s31 = sphi 0, %s33
      %s34 = sphi 0, %s31
      %s35 = sphi 0, %s34
      %s51 = sphi 0, %s35
      %s55 = sphi 0, %s55
      %s57 = sphi 0, %s55
      %s58 = sphi 0, %s57
      %s72 = sphi 0, %s58
      %s78 = sphi 0, %s80
      %s81 = sphi 0, %s78
      %s82 = sphi 0, %s81
      %s98 = sphi 0, %s82
      %s104 = sphi 0, %s106
      %s107 = sphi 0, %s104
      %s108 = sphi 0, %s107
      %s124 = sphi 0, %s108
      %s130 = sphi 0, %s132
      %s133 = sphi 0, %s130
      %s134 = sphi 0, %s133
      %s150 = sphi 0, %s134
    $region4: #{tpu_custom_call.1} parent=1 // loop_header_branch
      %24 = sbr.rel (%p22) target = $region8
    $region5: #{tpu_custom_call.1} parent=1 // loop_body
      %s26 = ssub.s32 %s21, 1
      %s27 = ssub.s32 %s21, 2
      %s28 = sadd.s32 %s21, 1
      %s29 = ssub.s32 %s21, %s28
      %p30 = scmp.eq.s32.totalorder %s29, 0
      %s32 = sadd.s32 %s31, 1
      %s33 = scalar_select %p30, %s31, %s32
      %p36 = pneg %p30
      %p37 = scmp.eq.s32.totalorder %s21, 1
      %p38 = por %p36, %p37
      %p39 = scmp.ne.s32.totalorder %s31, %s34
      %p40 = scmp.eq.s32.totalorder %s21, 0
      %p41 = por %p39, %p40
      %p42 = scmp.ne.s32.totalorder %s31, %s34
      %p43 = scmp.eq.s32.totalorder %s26, 1
      %p44 = por %p42, %p43
      %p45 = scmp.ne.s32.totalorder %s34, %s35
      %p46 = scmp.eq.s32.totalorder %s26, 0
      %p47 = por %p45, %p46
      %p48 = scmp.ne.s32.totalorder %s34, %s35
      %p49 = scmp.eq.s32.totalorder %s27, 1
      %p50 = por %p48, %p49
      %p52 = scmp.ne.s32.totalorder %s35, %s51
      %p53 = scmp.eq.s32.totalorder %s27, 0
      %p54 = por %p52, %p53
      %s56 = sadd.s32 %s55, 1
      %p59 = scmp.eq.s32.totalorder %s21, 1
      %p60 = scmp.ne.s32.totalorder %s55, %s57
      %p61 = scmp.eq.s32.totalorder %s21, 0
      %p62 = por %p60, %p61
      %p63 = scmp.ne.s32.totalorder %s55, %s57
      %p64 = scmp.eq.s32.totalorder %s26, 1
      %p65 = por %p63, %p64
      %p66 = scmp.ne.s32.totalorder %s57, %s58
      %p67 = scmp.eq.s32.totalorder %s26, 0
      %p68 = por %p66, %p67
      %p69 = scmp.ne.s32.totalorder %s57, %s58
      %p70 = scmp.eq.s32.totalorder %s27, 1
      %p71 = por %p69, %p70
      %p73 = scmp.ne.s32.totalorder %s58, %s72
      %p74 = scmp.eq.s32.totalorder %s27, 0
      %p75 = por %p73, %p74
      %s76 = ssub.s32 %s21, %s28
      %p77 = scmp.eq.s32.totalorder %s76, 0
      %s79 = sadd.s32 %s78, 1
      %s80 = scalar_select %p77, %s78, %s79
      %p83 = pneg %p77
      %p84 = scmp.eq.s32.totalorder %s21, 1
      %p85 = por %p83, %p84
      %p86 = scmp.ne.s32.totalorder %s78, %s81
      %p87 = scmp.eq.s32.totalorder %s21, 0
      %p88 = por %p86, %p87
      %p89 = scmp.ne.s32.totalorder %s78, %s81
      %p90 = scmp.eq.s32.totalorder %s26, 1
      %p91 = por %p89, %p90
      %p92 = scmp.ne.s32.totalorder %s81, %s82
      %p93 = scmp.eq.s32.totalorder %s26, 0
      %p94 = por %p92, %p93
      %p95 = scmp.ne.s32.totalorder %s81, %s82
      %p96 = scmp.eq.s32.totalorder %s27, 1
      %p97 = por %p95, %p96
      %p99 = scmp.ne.s32.totalorder %s82, %s98
      %p100 = scmp.eq.s32.totalorder %s27, 0
      %p101 = por %p99, %p100
      %s102 = ssub.s32 %s21, %s28
      %p103 = scmp.eq.s32.totalorder %s102, 0
      %s105 = sadd.s32 %s104, 1
      %s106 = scalar_select %p103, %s104, %s105
      %p109 = pneg %p103
      %p110 = scmp.eq.s32.totalorder %s21, 1
      %p111 = por %p109, %p110
      %p112 = scmp.ne.s32.totalorder %s104, %s107
      %p113 = scmp.eq.s32.totalorder %s21, 0
      %p114 = por %p112, %p113
      %p115 = scmp.ne.s32.totalorder %s104, %s107
      %p116 = scmp.eq.s32.totalorder %s26, 1
      %p117 = por %p115, %p116
      %p118 = scmp.ne.s32.totalorder %s107, %s108
      %p119 = scmp.eq.s32.totalorder %s26, 0
      %p120 = por %p118, %p119
      %p121 = scmp.ne.s32.totalorder %s107, %s108
      %p122 = scmp.eq.s32.totalorder %s27, 1
      %p123 = por %p121, %p122
      %p125 = scmp.ne.s32.totalorder %s108, %s124
      %p126 = scmp.eq.s32.totalorder %s27, 0
      %p127 = por %p125, %p126
      %s128 = ssub.s32 %s21, %s28
      %p129 = scmp.eq.s32.totalorder %s128, 0
      %s131 = sadd.s32 %s130, 1
      %s132 = scalar_select %p129, %s130, %s131
      %p135 = pneg %p129
      %p136 = scmp.eq.s32.totalorder %s21, 1
      %p137 = por %p135, %p136
      %p138 = scmp.ne.s32.totalorder %s130, %s133
      %p139 = scmp.eq.s32.totalorder %s21, 0
      %p140 = por %p138, %p139
      %p141 = scmp.ne.s32.totalorder %s130, %s133
      %p142 = scmp.eq.s32.totalorder %s26, 1
      %p143 = por %p141, %p142
      %p144 = scmp.ne.s32.totalorder %s133, %s134
      %p145 = scmp.eq.s32.totalorder %s26, 0
      %p146 = por %p144, %p145
      %p147 = scmp.ne.s32.totalorder %s133, %s134
      %p148 = scmp.eq.s32.totalorder %s27, 1
      %p149 = por %p147, %p148
      %p151 = scmp.ne.s32.totalorder %s134, %s150
      %p152 = scmp.eq.s32.totalorder %s27, 0
      %p153 = por %p151, %p152
      %p154 = scmp.le.s32.totalorder 1, %s21
      %p155 = scmp.lt.s32.totalorder %s21, 3
      %p156 = pnand %p154, %p155
      %p157 = pneg %p156
      // Predicated region
      $region9: #{tpu_custom_call.1} parent=5 // pred_check
        _
      $region10: #{tpu_custom_call.1} parent=5 // pred_check_branch
        %159 = sbr.rel (%p156) target = $region12
      $region11: #{tpu_custom_call.1} parent=5 // pred_region
        %s160 = ssub.s32 %s21, 1
        // Predicated region
        $region13: #{tpu_custom_call.1} parent=11 // pred_check
          %p161 = pneg %p68
        $region14: #{tpu_custom_call.1} parent=11 // pred_check_branch
          %163 = sbr.rel (%p161) target = $region16
        $region15: #{tpu_custom_call.1} parent=11 // pred_region
          %s165 = ssub.s32 1024, 1024
          %166 = vsyncadd [#allocation6], %s165
          %s167 = sshll.u32 [#allocation5], 4
          %s168 = int_to_ptr.vmem [resolvable:$true] %s167
          %173 = dma.hbm_to_vmem [thread:$0]  %s1, 1024, %s168, [#allocation6], 64, 64, 4
        $region16: #{tpu_custom_call.1} parent=11 // pred_fallthru
          _
      $region12: #{tpu_custom_call.1} parent=5 // pred_fallthru
        _
      %p174 = scmp.lt.s32.totalorder %s21, 2
      // Predicated region
      $region17: #{tpu_custom_call.1} parent=5 // pred_check
        %p175 = pneg %p174
      $region18: #{tpu_custom_call.1} parent=5 // pred_check_branch
        %177 = sbr.rel (%p175) target = $region20
      $region19: #{tpu_custom_call.1} parent=5 // pred_region
        // Predicated region
        $region21: #{tpu_custom_call.1} parent=19 // pred_check
          %p178 = pneg %p41
        $region22: #{tpu_custom_call.1} parent=19 // pred_check_branch
          %180 = sbr.rel (%p178) target = $region24
        $region23: #{tpu_custom_call.1} parent=19 // pred_region
          %s181 = sand.u32 %s31, 1
          %s182 = scalar_lea.sflag [#allocation3], %s181
          %s183 = sand.u32 %s31, 1
          %s184 = smul.addr %s183, 32
          %s185 = scalar_lea.vmem [#allocation2], %s184
          %s186 = smul.u32 8, %s21
          %s188 = ssub.s32 512, 512
          %189 = vsyncadd %s182, %s188
          %s190 = smul.addr %s186, 64
          %s191 = scalar_lea.hbm %s0, %s190
          %s192 = sshll.u32 %s185, 4
          %s193 = int_to_ptr.vmem [resolvable:$true] %s192
          %198 = dma.hbm_to_vmem [thread:$0]  %s191, 512, %s193, %s182, 64, 64, 4
        $region24: #{tpu_custom_call.1} parent=19 // pred_fallthru
          _
      $region20: #{tpu_custom_call.1} parent=5 // pred_fallthru
        _
      %p199 = scmp.le.s32.totalorder 1, %s21
      %p200 = scmp.lt.s32.totalorder %s21, 3
      %p201 = pnand %p199, %p200
      %p202 = pneg %p201
      // Predicated region
      $region25: #{tpu_custom_call.1} parent=5 // pred_check
        _
      $region26: #{tpu_custom_call.1} parent=5 // pred_check_branch
        %204 = sbr.rel (%p201) target = $region28
      $region27: #{tpu_custom_call.1} parent=5 // pred_region
        %s205 = ssub.s32 %s21, 1
        %s206 = sand.u32 %s34, 1
        %s207 = scalar_lea.sflag [#allocation3], %s206
        %s208 = sand.u32 %s34, 1
        %s209 = smul.addr %s208, 32
        %s210 = scalar_lea.vmem [#allocation2], %s209
        // Predicated region
        $region29: #{tpu_custom_call.1} parent=27 // pred_check
          %p211 = pneg %p47
        $region30: #{tpu_custom_call.1} parent=27 // pred_check_branch
          %213 = sbr.rel (%p211) target = $region32
        $region31: #{tpu_custom_call.1} parent=27 // pred_region
          %214 = dma.done %s207, 512
        $region32: #{tpu_custom_call.1} parent=27 // pred_fallthru
          _
        // Predicated region
        $region33: #{tpu_custom_call.1} parent=27 // pred_check
          %p215 = pneg %p68
        $region34: #{tpu_custom_call.1} parent=27 // pred_check_branch
          %217 = sbr.rel (%p215) target = $region36
        $region35: #{tpu_custom_call.1} parent=27 // pred_region
          %218 = dma.done [#allocation6], 1024
        $region36: #{tpu_custom_call.1} parent=27 // pred_fallthru
          _
        %s219 = sand.u32 %s34, 1
        %s220 = scalar_lea.sflag [#allocation3], %s219
        %s221 = sand.u32 %s34, 1
        %s222 = smul.addr %s221, 32
        %s223 = scalar_lea.vmem [#allocation2], %s222
        %p224 = pneg %p47
        %p225 = pneg %p44
        %p226 = pneg %p68
        %p227 = pneg %p65
        %p228 = pneg %p94
        %p229 = pneg %p91
        %s230 = sand.u32 %s81, 1
        %s231 = scalar_lea.sflag [#allocation4], %s230
        %s232 = sand.u32 %s81, 1
        %s233 = smul.addr %s232, 32
        %s234 = scalar_lea.vmem [#allocation7], %s233
        %p235 = pneg %p120
        %p236 = pneg %p117
        %s237 = sand.u32 %s26, 1
        %s238 = scalar_lea.sflag [#allocation9], %s237
        %s239 = sand.u32 %s107, 1
        %s240 = scalar_lea.vmem [#allocation8], %s239
        %p241 = pneg %p146
        %p242 = pneg %p143
        %s243 = sand.u32 %s26, 1
        %s244 = scalar_lea.sflag [#allocation9], %s243
        %s245 = sand.u32 %s133, 1
        %s246 = scalar_lea.vmem [#allocation10], %s245
        %s247 = smul.u32 8, %s26
        %s248 = smul.u32 8, %s26
        %v250 = vld [vmem:[%s210] sm:$0xf]
        %v251 = vld [vmem:[%s210 + $0x4] sm:$0xf]
        %v252 = vld [vmem:[%s210 + $0x8] sm:$0xf]
        %v253 = vld [vmem:[%s210 + $0xc] sm:$0xf]
        %v254 = vld [vmem:[%s210 + $0x10] sm:$0xf]
        %v255 = vld [vmem:[%s210 + $0x14] sm:$0xf]
        %v256 = vld [vmem:[%s210 + $0x18] sm:$0xf]
        %v257 = vld [vmem:[%s210 + $0x1c] sm:$0xf]
        %v258 = vld [vmem:[#allocation5] sm:$0xf]
        %v259 = vld [vmem:[#allocation5 + $0x4] sm:$0xf]
        %v260 = vld [vmem:[#allocation5 + $0x8] sm:$0xf]
        %v261 = vld [vmem:[#allocation5 + $0xc] sm:$0xf]
        %v262 = vld [vmem:[#allocation5 + $0x10] sm:$0xf]
        %v263 = vld [vmem:[#allocation5 + $0x14] sm:$0xf]
        %v264 = vld [vmem:[#allocation5 + $0x18] sm:$0xf]
        %v265 = vld [vmem:[#allocation5 + $0x1c] sm:$0xf]
        %v266 = vld [vmem:[#allocation5 + $0x20] sm:$0xf]
        %v267 = vld [vmem:[#allocation5 + $0x24] sm:$0xf]
        %v268 = vld [vmem:[#allocation5 + $0x28] sm:$0xf]
        %v269 = vld [vmem:[#allocation5 + $0x2c] sm:$0xf]
        %v270 = vld [vmem:[#allocation5 + $0x30] sm:$0xf]
        %v271 = vld [vmem:[#allocation5 + $0x34] sm:$0xf]
        %v272 = vld [vmem:[#allocation5 + $0x38] sm:$0xf]
        %v273 = vld [vmem:[#allocation5 + $0x3c] sm:$0xf]
        %v282 = vunpack.c.l.b16 %v250
        %v283 = vunpack.c.l.b16 %v251
        %v284 = vunpack.c.l.b16 %v252
        %v285 = vunpack.c.l.b16 %v253
        %v286 = vunpack.c.l.b16 %v254
        %v287 = vunpack.c.l.b16 %v255
        %v288 = vunpack.c.l.b16 %v256
        %v289 = vunpack.c.l.b16 %v257
        %v290 = vpack.c.b16 %v283, %v282
        %v291 = vpack.c.b16 %v285, %v284
        %v292 = vpack.c.b16 %v287, %v286
        %v293 = vpack.c.b16 %v289, %v288
        %v314 = vunpack.c.l.b16 %v258
        %v315 = vunpack.c.l.b16 %v259
        %v316 = vunpack.c.l.b16 %v260
        %v317 = vunpack.c.l.b16 %v261
        %v318 = vunpack.c.l.b16 %v262
        %v319 = vunpack.c.l.b16 %v263
        %v320 = vunpack.c.l.b16 %v264
        %v321 = vunpack.c.l.b16 %v265
        %v322 = vunpack.c.l.b16 %v266
        %v323 = vunpack.c.l.b16 %v267
        %v324 = vunpack.c.l.b16 %v268
        %v325 = vunpack.c.l.b16 %v269
        %v326 = vunpack.c.l.b16 %v270
        %v327 = vunpack.c.l.b16 %v271
        %v328 = vunpack.c.l.b16 %v272
        %v329 = vunpack.c.l.b16 %v273
        %v330 = vpack.c.b16 %v315, %v314
        %v331 = vpack.c.b16 %v317, %v316
        %v332 = vpack.c.b16 %v319, %v318
        %v333 = vpack.c.b16 %v321, %v320
        %v334 = vpack.c.b16 %v323, %v322
        %v335 = vpack.c.b16 %v325, %v324
        %v336 = vpack.c.b16 %v327, %v326
        %v337 = vpack.c.b16 %v329, %v328
        %346 = vmatprep.subr.bf16.mxu0 0
        %347 = vmatpush1.bf16.msra.mxu0 %v330
        %348 = vmatprep.subr.bf16.mxu0 0
        %349 = vmatpush1.bf16.msra.mxu0 %v331
        %350 = vmatprep.subr.bf16.mxu0 0
        %351 = vmatpush1.bf16.msra.mxu0 %v332
        %352 = vmatprep.subr.bf16.mxu0 0
        %353 = vmatpush1.bf16.msra.mxu0 %v333
        %354 = vmatprep.subr.bf16.mxu0 0
        %355 = vmatpush1.bf16.msra.mxu0 %v334
        %356 = vmatprep.subr.bf16.mxu0 0
        %357 = vmatpush1.bf16.msra.mxu0 %v335
        %358 = vmatprep.subr.bf16.mxu0 0
        %359 = vmatpush1.bf16.msra.mxu0 %v336
        %360 = vmatprep.subr.bf16.mxu0 0
        %361 = vmatpush1.bf16.msra.mxu0 %v337
        %362 = vmatprep.subr.bf16.mxu0 0
        %363 = vmatpush1.bf16.msra.mxu0 0
        %364 = vmatprep.subr.bf16.mxu0 0
        %365 = vmatpush1.bf16.msra.mxu0 0
        %366 = vmatprep.subr.bf16.mxu0 0
        %367 = vmatpush1.bf16.msra.mxu0 0
        %368 = vmatprep.subr.bf16.mxu0 0
        %369 = vmatpush1.bf16.msra.mxu0 0
        %370 = vmatprep.subr.bf16.mxu0 0
        %371 = vmatpush1.bf16.msra.mxu0 0
        %372 = vmatprep.subr.bf16.mxu0 0
        %373 = vmatpush1.bf16.msra.mxu0 0
        %374 = vmatprep.subr.bf16.mxu0 0
        %375 = vmatpush1.bf16.msra.mxu0 0
        %376 = vmatprep.subr.bf16.mxu0 0
        %377 = vmatpush1.bf16.msra.mxu0 0
        %378 = vmatprep.mubr.bf16.mxu0 0
        %379 = vmatmul.mubr.bf16.gmra.mrb[0].mxu0 %v290
        %v380 = vpop.f32.mrb[0].mxu0
        %v381 = vadd.f32 0.0, %v380
        %v382 = vpop.f32.mrb[0].mxu0
        %v383 = vpop.f32.mrb[0].mxu0
        %v384 = vadd.f32 0.0, %v383
        %v385 = vpop.f32.mrb[0].mxu0
        %386 = vmatprep.mubr.bf16.mxu0 0
        %387 = vmatmul.mubr.bf16.gmra.mrb[0].mxu0 %v291
        %v388 = vpop.f32.mrb[0].mxu0
        %v389 = vadd.f32 0.0, %v388
        %v390 = vpop.f32.mrb[0].mxu0
        %v391 = vpop.f32.mrb[0].mxu0
        %v392 = vadd.f32 0.0, %v391
        %v393 = vpop.f32.mrb[0].mxu0
        %394 = vmatprep.mubr.bf16.mxu0 0
        %395 = vmatmul.mubr.bf16.gmra.mrb[0].mxu0 %v292
        %v396 = vpop.f32.mrb[0].mxu0
        %v397 = vadd.f32 0.0, %v396
        %v398 = vpop.f32.mrb[0].mxu0
        %v399 = vpop.f32.mrb[0].mxu0
        %v400 = vadd.f32 0.0, %v399
        %v401 = vpop.f32.mrb[0].mxu0
        %402 = vmatprep.mubr.bf16.mxu0 0
        %403 = vmatmul.mubr.bf16.gmra.mrb[0].mxu0 %v293
        %v404 = vpop.f32.mrb[0].mxu0
        %v405 = vadd.f32 0.0, %v404
        %v406 = vpop.f32.mrb[0].mxu0
        %v407 = vpop.f32.mrb[0].mxu0
        %v408 = vadd.f32 0.0, %v407
        %v409 = vpop.f32.mrb[0].mxu0
        %410 = vdwg.mxu0
        %v411 = vpack.c.bf16 %v384, %v381
        %v412 = vpack.c.bf16 %v392, %v389
        %v413 = vpack.c.bf16 %v400, %v397
        %v414 = vpack.c.bf16 %v408, %v405
        %v419 = vunpack.c.l.b16 %v411
        %v420 = vunpack.c.h.b16 %v411
        %v421 = vunpack.c.l.b16 %v412
        %v422 = vunpack.c.h.b16 %v412
        %v423 = vunpack.c.l.b16 %v413
        %v424 = vunpack.c.h.b16 %v413
        %v425 = vunpack.c.l.b16 %v414
        %v426 = vunpack.c.h.b16 %v414
        %v427 = vpack.c.b16 %v419, %v419
        %v428 = vpack.c.b16 %v420, %v420
        %v429 = vpack.c.b16 %v421, %v421
        %v430 = vpack.c.b16 %v422, %v422
        %v431 = vpack.c.b16 %v423, %v423
        %v432 = vpack.c.b16 %v424, %v424
        %v433 = vpack.c.b16 %v425, %v425
        %v434 = vpack.c.b16 %v426, %v426
        %443 = vst [vmem:[%s234] sm:$0xf] %v427
        %444 = vst [vmem:[%s234 + $0x4] sm:$0xf] %v428
        %445 = vst [vmem:[%s234 + $0x8] sm:$0xf] %v429
        %446 = vst [vmem:[%s234 + $0xc] sm:$0xf] %v430
        %447 = vst [vmem:[%s234 + $0x10] sm:$0xf] %v431
        %448 = vst [vmem:[%s234 + $0x14] sm:$0xf] %v432
        %449 = vst [vmem:[%s234 + $0x18] sm:$0xf] %v433
        %450 = vst [vmem:[%s234 + $0x1c] sm:$0xf] %v434
        %v451 = vadd.f32 %v381, %v384
        %v452 = vadd.f32 %v451, %v389
        %v453 = vadd.f32 %v452, %v392
        %v454 = vadd.f32 %v453, %v397
        %v455 = vadd.f32 %v454, %v400
        %v456 = vadd.f32 %v455, %v405
        %v457 = vadd.f32 %v456, %v408
        %v458 = vrot.slane %v457, 4
        %v459 = vadd.f32 %v457, %v458
        %v460 = vrot.slane %v459, 2
        %v461 = vadd.f32 %v459, %v460
        %v462 = vrot.slane %v461, 1
        %v463 = vadd.f32 %v461, %v462
        %464 = vst [vmem:[%s240] sm:$0x1] %v463
        %v465 = vmul.f32 %v381, %v381
        %v466 = vmul.f32 %v384, %v384
        %v467 = vmul.f32 %v389, %v389
        %v468 = vmul.f32 %v392, %v392
        %v469 = vmul.f32 %v397, %v397
        %v470 = vmul.f32 %v400, %v400
        %v471 = vmul.f32 %v405, %v405
        %v472 = vmul.f32 %v408, %v408
        %v473 = vadd.f32 %v465, %v466
        %v474 = vadd.f32 %v473, %v467
        %v475 = vadd.f32 %v474, %v468
        %v476 = vadd.f32 %v475, %v469
        %v477 = vadd.f32 %v476, %v470
        %v478 = vadd.f32 %v477, %v471
        %v479 = vadd.f32 %v478, %v472
        %v480 = vrot.slane %v479, 4
        %v481 = vadd.f32 %v479, %v480
        %v482 = vrot.slane %v481, 2
        %v483 = vadd.f32 %v481, %v482
        %v484 = vrot.slane %v483, 1
        %v485 = vadd.f32 %v483, %v484
        %486 = vst [vmem:[%s246] sm:$0x1] %v485
        %s487 = sand.u32 %s81, 1
        %s488 = scalar_lea.sflag [#allocation4], %s487
        %s489 = sand.u32 %s81, 1
        %s490 = smul.addr %s489, 32
        %s491 = scalar_lea.vmem [#allocation7], %s490
        %s492 = sand.u32 %s26, 1
        %s493 = scalar_lea.sflag [#allocation9], %s492
        %s494 = sand.u32 %s107, 1
        %s495 = scalar_lea.vmem [#allocation8], %s494
        %s496 = sand.u32 %s26, 1
        %s497 = scalar_lea.sflag [#allocation9], %s496
        %s498 = sand.u32 %s133, 1
        %s499 = scalar_lea.vmem [#allocation10], %s498
        // Predicated region
        $region37: #{tpu_custom_call.1} parent=27 // pred_check
          %p500 = pneg %p91
        $region38: #{tpu_custom_call.1} parent=27 // pred_check_branch
          %502 = sbr.rel (%p500) target = $region40
        $region39: #{tpu_custom_call.1} parent=27 // pred_region
          %s503 = smul.u32 8, %s26
          %s505 = ssub.s32 512, 512
          %506 = vsyncadd %s488, %s505
          %s507 = smul.addr %s503, 64
          %s508 = scalar_lea.hbm %s2, %s507
          %s509 = sshll.u32 %s491, 4
          %s510 = int_to_ptr.vmem [resolvable:$true] %s509
          %515 = dma.vmem_to_hbm [thread:$0]  %s510, 512, %s508, %s488, 64, 64, 4
        $region40: #{tpu_custom_call.1} parent=27 // pred_fallthru
          _
        // Predicated region
        $region41: #{tpu_custom_call.1} parent=27 // pred_check
          %p516 = pneg %p117
        $region42: #{tpu_custom_call.1} parent=27 // pred_check_branch
          %518 = sbr.rel (%p516) target = $region44
        $region43: #{tpu_custom_call.1} parent=27 // pred_region
          %s520 = ssub.s32 16, 16
          %521 = vsyncadd %s493, %s520
          %s522 = smul.addr %s26, 16
          %s523 = scalar_lea.hbm %s3, %s522
          %s525 = sshll.u32 %s495, 4
          %s526 = int_to_ptr.vmem [resolvable:$true] %s525
          %528 = dma.vmem_to_hbm [thread:$0]  %s526, 16, %s523, %s493
        $region44: #{tpu_custom_call.1} parent=27 // pred_fallthru
          _
        // Predicated region
        $region45: #{tpu_custom_call.1} parent=27 // pred_check
          %p529 = pneg %p143
        $region46: #{tpu_custom_call.1} parent=27 // pred_check_branch
          %531 = sbr.rel (%p529) target = $region48
        $region47: #{tpu_custom_call.1} parent=27 // pred_region
          %s533 = ssub.s32 16, 16
          %534 = vsyncadd %s497, %s533
          %s535 = smul.addr %s26, 16
          %s536 = scalar_lea.hbm %s4, %s535
          %s538 = sshll.u32 %s499, 4
          %s539 = int_to_ptr.vmem [resolvable:$true] %s538
          %541 = dma.vmem_to_hbm [thread:$0]  %s539, 16, %s536, %s497
        $region48: #{tpu_custom_call.1} parent=27 // pred_fallthru
          _
      $region28: #{tpu_custom_call.1} parent=5 // pred_fallthru
        _
      %p542 = scmp.le.s32.totalorder 2, %s21
      // Predicated region
      $region49: #{tpu_custom_call.1} parent=5 // pred_check
        %p543 = pneg %p542
      $region50: #{tpu_custom_call.1} parent=5 // pred_check_branch
        %545 = sbr.rel (%p543) target = $region52
      $region51: #{tpu_custom_call.1} parent=5 // pred_region
        %s546 = ssub.s32 %s21, 2
        // Predicated region
        $region53: #{tpu_custom_call.1} parent=51 // pred_check
          %p547 = pneg %p97
        $region54: #{tpu_custom_call.1} parent=51 // pred_check_branch
          %549 = sbr.rel (%p547) target = $region56
        $region55: #{tpu_custom_call.1} parent=51 // pred_region
          %s550 = sand.u32 %s82, 1
          %s551 = scalar_lea.sflag [#allocation4], %s550
          %s552 = sand.u32 %s82, 1
          %s553 = smul.addr %s552, 32
          %s554 = scalar_lea.vmem [#allocation7], %s553
          %555 = dma.done %s551, 512
        $region56: #{tpu_custom_call.1} parent=51 // pred_fallthru
          _
        // Predicated region
        $region57: #{tpu_custom_call.1} parent=51 // pred_check
          %p556 = pneg %p123
        $region58: #{tpu_custom_call.1} parent=51 // pred_check_branch
          %558 = sbr.rel (%p556) target = $region60
        $region59: #{tpu_custom_call.1} parent=51 // pred_region
          %s559 = sand.u32 %s27, 1
          %s560 = scalar_lea.sflag [#allocation9], %s559
          %s561 = sand.u32 %s108, 1
          %s562 = scalar_lea.vmem [#allocation8], %s561
          %563 = dma.done %s560, 16
        $region60: #{tpu_custom_call.1} parent=51 // pred_fallthru
          _
        // Predicated region
        $region61: #{tpu_custom_call.1} parent=51 // pred_check
          %p564 = pneg %p149
        $region62: #{tpu_custom_call.1} parent=51 // pred_check_branch
          %566 = sbr.rel (%p564) target = $region64
        $region63: #{tpu_custom_call.1} parent=51 // pred_region
          %s567 = sand.u32 %s27, 1
          %s568 = scalar_lea.sflag [#allocation9], %s567
          %s569 = sand.u32 %s134, 1
          %s570 = scalar_lea.vmem [#allocation10], %s569
          %571 = dma.done %s568, 16
        $region64: #{tpu_custom_call.1} parent=51 // pred_fallthru
          _
      $region52: #{tpu_custom_call.1} parent=5 // pred_fallthru
        _
    $region6: #{tpu_custom_call.1} parent=1 // loop_footer
      %s25 = sadd.s32 1, %s21
    $region7: #{tpu_custom_call.1} parent=1 // loop_footer_branch
      %20 = sbr.rel target = $region3
    $region8: #{tpu_custom_call.1} parent=1 // loop_exit
      _
    %572 = vsyncpa [#allocation3], 1
    %s573 = scalar_lea.sflag [#allocation3], 1
    %574 = vsyncpa %s573, 1
    %575 = vsyncpa [#allocation6], 1
    %576 = vsyncpa [#allocation4], 1
    %s577 = scalar_lea.sflag [#allocation4], 1
    %578 = vsyncpa %s577, 1
    %579 = vsyncpa [#allocation9], 1
    %s580 = scalar_lea.sflag [#allocation9], 1
    %581 = vsyncpa %s580, 1

</llo_original>
